<compile_context>
chip_gen: v5e
topology: v5e:2x2
jax: 0.10.0
libtpu: 0.0.40
codegen_flags: <defaults>
</compile_context>

<pallas_src>
import functools

import jax
import jax.numpy as jnp
import numpy as np
from jax.experimental import pallas as pl
from jax.experimental.pallas import tpu as pltpu


# ---------------------------------------------------------------------------
# Kernel 1: ConvTranspose2d(Cin, Cup, k=2, s=2) -- one image per grid step.
# Single dot with N = 4*cup; output layout [n, h1, 2(di), w1, 2*cup(dj,oc)] reshapes
# for free (pure row-major merge) to interleaved NHWC [n, 2h1, 2w1, cup].
# ---------------------------------------------------------------------------
def _upsample2x2_kernel(x1_ref, w_ref, b_ref, o_ref):
    _, h1, w1, cin = x1_ref.shape
    ncol = w_ref.shape[1]                       # 4*cup, columns ordered (di, dj, oc)
    half = ncol // 2                            # 2*cup  -> (dj, oc)
    x = x1_ref[0].reshape(h1 * w1, cin)
    y = jnp.dot(x, w_ref[...], preferred_element_type=jnp.float32) + b_ref[...]
    o_ref[0:1, :, 0:1, :, :] = y[:, :half].reshape(1, h1, 1, w1, half).astype(o_ref.dtype)
    o_ref[0:1, :, 1:2, :, :] = y[:, half:].reshape(1, h1, 1, w1, half).astype(o_ref.dtype)


def conv_transpose_2x2(x1_nhwc, wt, bt):
    """y[n, 2i+di, 2j+dj, oc] = sum_c x1[n,i,j,c] * wt[c,oc,di,dj] + bt[oc]."""
    n, h1, w1, cin = x1_nhwc.shape
    cup = wt.shape[1]
    # [cin, cup, 2, 2] -> [cin, (di, dj, oc)]
    wk = jnp.transpose(wt, (0, 2, 3, 1)).reshape(cin, 4 * cup).astype(jnp.bfloat16)
    bk = jnp.tile(bt, 4).reshape(1, 4 * cup).astype(jnp.float32)
    y5 = pl.pallas_call(
        _upsample2x2_kernel,
        out_shape=jax.ShapeDtypeStruct((n, h1, 2, w1, 2 * cup), jnp.bfloat16),
        grid_spec=pltpu.PrefetchScalarGridSpec(
            num_scalar_prefetch=0,
            grid=(n,),
            in_specs=[
                pl.BlockSpec((1, h1, w1, cin), lambda b: (b, 0, 0, 0)),
                pl.BlockSpec((cin, 4 * cup), lambda b: (0, 0)),
                pl.BlockSpec((1, 4 * cup), lambda b: (0, 0)),
            ],
            out_specs=pl.BlockSpec((1, h1, 2, w1, 2 * cup), lambda b: (b, 0, 0, 0, 0)),
        ),
        compiler_params=pltpu.CompilerParams(dimension_semantics=("parallel",)),
    )(x1_nhwc.astype(jnp.bfloat16), wk, bk)
    # Pure-metadata reshape to interleaved NHWC.
    return y5.reshape(n, 2 * h1, 2 * w1, cup)


# ---------------------------------------------------------------------------
# Kernel 2: fused pad + concat + relu + conv3x3 + relu + conv3x3 + relu
#           (one image per grid step; per-row-block im2col + single big-K dots).
# ---------------------------------------------------------------------------
def _fused_up_block_kernel(x2_ref, y_ref, w1_ref, b1_ref, w2_ref, b2_ref, o_ref,
                           xcp_ref, hp_ref, col1_ref, col2_ref, *, py0, px0, th):
    _, H, W, cx2 = x2_ref.shape
    _, Hy, Wy, cup = y_ref.shape
    ccat = cx2 + cup
    cmid = w1_ref.shape[1]
    bf = xcp_ref.dtype

    # ---- zero only the 1-px halo + F.pad bands (interiors are fully rewritten every
    #      grid step, so no full-buffer zero sweeps are needed) ----
    xcp_ref[0:1, :, :] = jnp.zeros((1, W + 2, ccat), bf)
    xcp_ref[H + 1:H + 2, :, :] = jnp.zeros((1, W + 2, ccat), bf)
    xcp_ref[1:H + 1, 0:1, :] = jnp.zeros((H, 1, ccat), bf)
    xcp_ref[1:H + 1, W + 1:W + 2, :] = jnp.zeros((H, 1, ccat), bf)
    hp_ref[0:1, :, :] = jnp.zeros((1, W + 2, cmid), bf)
    hp_ref[H + 1:H + 2, :, :] = jnp.zeros((1, W + 2, cmid), bf)
    hp_ref[1:H + 1, 0:1, :] = jnp.zeros((H, 1, cmid), bf)
    hp_ref[1:H + 1, W + 1:W + 2, :] = jnp.zeros((H, 1, cmid), bf)
    # Constant F.pad bands of the upsampled map (only the y channel half).
    if py0 > 0:
        xcp_ref[1:1 + py0, 1:W + 1, cx2:] = jnp.zeros((py0, W, cup), bf)
    if H - py0 - Hy > 0:
        xcp_ref[1 + py0 + Hy:H + 1, 1:W + 1, cx2:] = jnp.zeros((H - py0 - Hy, W, cup), bf)
    if px0 > 0:
        xcp_ref[1 + py0:1 + py0 + Hy, 1:1 + px0, cx2:] = jnp.zeros((Hy, px0, cup), bf)
    if W - px0 - Wy > 0:
        xcp_ref[1 + py0:1 + py0 + Hy, 1 + px0 + Wy:W + 1, cx2:] = (
            jnp.zeros((Hy, W - px0 - Wy, cup), bf))

    # ---- concat([x2, y]) lives only in VMEM.  relu(relu(x)) == relu(x), and relu(0)==0
    #      commutes with the zero padding, so relu is applied pre-pad. ----
    xcp_ref[1:H + 1, 1:W + 1, :cx2] = jnp.maximum(x2_ref[0], 0.0).astype(bf)
    xcp_ref[1 + py0:1 + py0 + Hy, 1 + px0:1 + px0 + Wy, cx2:] = (
        jnp.maximum(y_ref[0], 0.0).astype(bf))

    nblk = H // th

    # ---- conv1 (3x3, pad=1): per row block stage im2col [th*W, 9*ccat] once, then one
    #      big-K MXU dot (f32 accumulation), relu, store into padded VMEM activation. ----
    for rb in range(nblk):
        r0 = rb * th
        for t in range(9):
            dy, dx = t // 3, t % 3
            win = xcp_ref[r0 + dy:r0 + dy + th, dx:dx + W, :]
            col1_ref[:, t * ccat:(t + 1) * ccat] = win.reshape(th * W, ccat)
        acc = jnp.dot(col1_ref[...], w1_ref[...], preferred_element_type=jnp.float32)
        h = jnp.maximum(acc + b1_ref[...], 0.0)                    # [th*W, cmid] f32
        hp_ref[1 + r0:1 + r0 + th, 1:W + 1, :] = h.reshape(th, W, cmid).astype(bf)

    # ---- conv2 (3x3, pad=1) on the conv1 activation kept in VMEM. ----
    for rb in range(nblk):
        r0 = rb * th
        for t in range(9):
            dy, dx = t // 3, t % 3
            win = hp_ref[r0 + dy:r0 + dy + th, dx:dx + W, :]
            col2_ref[:, t * cmid:(t + 1) * cmid] = win.reshape(th * W, cmid)
        acc = jnp.dot(col2_ref[...], w2_ref[...], preferred_element_type=jnp.float32)
        out = jnp.maximum(acc + b2_ref[...], 0.0)                  # [th*W, cout] f32
        cout = out.shape[1]
        # NCHW-flat store; transpose kept because cout < 128 here.  For cout >= 128 a
        # NHWC-flat [H*W, cout] output would already be lane-dense and the transpose
        # should be dropped.
        o_ref[0:1, :, r0 * W:(r0 + th) * W] = (
            out.T.reshape(1, cout, th * W).astype(o_ref.dtype))


def fused_pad_concat_doubleconv(x2_nhwc, y_nhwc, w1c, b1c, w2c, b2c, py0, px0):
    n, H, W, cx2 = x2_nhwc.shape
    _, Hy, Wy, cup = y_nhwc.shape
    ccat = cx2 + cup
    cmid, cout = w1c.shape[0], w2c.shape[0]

    # Row-block height: per-dot M ~= 256-512 rows so the f32 accumulator stays in vregs.
    target = max(1, 512 // W)
    th = 1
    for cand in range(min(H, target), 0, -1):
        if H % cand == 0:
            th = cand
            break

    # PyTorch [Cout, Cin, 3, 3] -> single tap-major, concat-channel weight [9*Cin, Cout].
    w1k = jnp.transpose(w1c, (2, 3, 1, 0)).reshape(9 * ccat, cmid).astype(jnp.bfloat16)
    w2k = jnp.transpose(w2c, (2, 3, 1, 0)).reshape(9 * cmid, cout).astype(jnp.bfloat16)
    b1k = b1c.reshape(1, cmid).astype(jnp.float32)
    b2k = b2c.reshape(1, cout).astype(jnp.float32)

    # VMEM budget: scratches + double-buffered input/output blocks (+2x headroom).
    scratch_bytes = 2 * ((H + 2) * (W + 2) * ccat + (H + 2) * (W + 2) * cmid
                         + th * W * 9 * ccat + th * W * 9 * cmid)
    io_bytes = 2 * (2 * H * W * cx2 + 2 * Hy * Wy * cup
                    + 2 * 9 * ccat * cmid + 2 * 9 * cmid * cout
                    + 4 * cmid + 4 * cout + 4 * cout * H * W)
    vmem_limit = int(min(96 << 20, max(32 << 20, 2 * (scratch_bytes + io_bytes))))

    kernel = functools.partial(_fused_up_block_kernel, py0=py0, px0=px0, th=th)
    out = pl.pallas_call(
        kernel,
        out_shape=jax.ShapeDtypeStruct((n, cout, H * W), jnp.float32),
        grid_spec=pltpu.PrefetchScalarGridSpec(
            num_scalar_prefetch=0,
            grid=(n,),
            in_specs=[
                pl.BlockSpec((1, H, W, cx2), lambda b: (b, 0, 0, 0)),
                pl.BlockSpec((1, Hy, Wy, cup), lambda b: (b, 0, 0, 0)),
                pl.BlockSpec((9 * ccat, cmid), lambda b: (0, 0)),
                pl.BlockSpec((1, cmid), lambda b: (0, 0)),
                pl.BlockSpec((9 * cmid, cout), lambda b: (0, 0)),
                pl.BlockSpec((1, cout), lambda b: (0, 0)),
            ],
            out_specs=pl.BlockSpec((1, cout, H * W), lambda b: (b, 0, 0)),
            scratch_shapes=[
                pltpu.VMEM((H + 2, W + 2, ccat), jnp.bfloat16),   # padded concat input
                pltpu.VMEM((H + 2, W + 2, cmid), jnp.bfloat16),   # padded conv1 act
                pltpu.VMEM((th * W, 9 * ccat), jnp.bfloat16),     # conv1 im2col tile
                pltpu.VMEM((th * W, 9 * cmid), jnp.bfloat16),     # conv2 im2col tile
            ],
        ),
        compiler_params=pltpu.CompilerParams(
            dimension_semantics=("parallel",),
            vmem_limit_bytes=vmem_limit),
    )(x2_nhwc.astype(jnp.bfloat16), y_nhwc.astype(jnp.bfloat16), w1k, b1k, w2k, b2k)
    return out.reshape(n, cout, H, W)


# ---------------------------------------------------------------------------
# Up.forward (public API in NCHW, like PyTorch)
# ---------------------------------------------------------------------------
def up_forward(params, x1_nchw, x2_nchw):
    x1 = jnp.transpose(x1_nchw, (0, 2, 3, 1)).astype(jnp.float32)   # NHWC
    x2 = jnp.transpose(x2_nchw, (0, 2, 3, 1)).astype(jnp.float32)   # NHWC
    n, H, W, _ = x2.shape

    # self.up : ConvTranspose2d(Cin, Cin//2, k=2, s=2)
    y = conv_transpose_2x2(x1, params["up_w"], params["up_b"])      # [n, 2h1, 2w1, cup]

    # F.pad placement to x2's spatial size (negative pads crop, like F.pad).
    diff_y, diff_x = H - y.shape[1], W - y.shape[2]
    py0, py1 = diff_y // 2, diff_y - diff_y // 2
    px0, px1 = diff_x // 2, diff_x - diff_x // 2
    ct, cb = max(0, -py0), max(0, -py1)
    cl, cr = max(0, -px0), max(0, -px1)
    if ct or cb or cl or cr:
        y = y[:, ct:y.shape[1] - cb, cl:y.shape[2] - cr, :]
    py0, px0 = max(py0, 0), max(px0, 0)

    # cat([x2, y], channel) + relu + conv3x3 + relu + conv3x3 + relu, all fused.
    return fused_pad_concat_doubleconv(
        x2, y, params["conv1_w"], params["conv1_b"],
        params["conv2_w"], params["conv2_b"], py0, px0)             # NCHW


# ---------------------------------------------------------------------------
# Pure-JAX f32 reference (correctness check)
# ---------------------------------------------------------------------------
def _conv3x3_ref(x_nhwc, w_oihw, b):
    w_hwio = jnp.transpose(w_oihw, (2, 3, 1, 0))
    y = jax.lax.conv_general_dilated(
        x_nhwc, w_hwio, (1, 1), "SAME",
        dimension_numbers=("NHWC", "HWIO", "NHWC"))
    return y + b


def up_reference(params, x1_nchw, x2_nchw):
    x1 = jnp.transpose(x1_nchw, (0, 2, 3, 1))
    x2 = jnp.transpose(x2_nchw, (0, 2, 3, 1))
    wt, bt = params["up_w"], params["up_b"]
    n, h1, w1, cin = x1.shape
    cup = wt.shape[1]
    t = jnp.einsum("nhwc,codk->nhwdko", x1, wt)
    y = t.transpose(0, 1, 3, 2, 4, 5).reshape(n, 2 * h1, 2 * w1, cup) + bt
    diff_y = x2.shape[1] - y.shape[1]
    diff_x = x2.shape[2] - y.shape[2]
    y = jnp.pad(y, ((0, 0),
                    (diff_y // 2, diff_y - diff_y // 2),
                    (diff_x // 2, diff_x - diff_x // 2),
                    (0, 0)))
    x = jnp.concatenate([x2, y], axis=-1)
    x = jnp.maximum(jnp.maximum(x, 0.0), 0.0)
    x = jnp.maximum(_conv3x3_ref(x, params["conv1_w"], params["conv1_b"]), 0.0)
    x = jnp.maximum(_conv3x3_ref(x, params["conv2_w"], params["conv2_b"]), 0.0)
    return jnp.transpose(x, (0, 3, 1, 2))


if __name__ == "__main__":
    key = jax.random.PRNGKey(0)
    in_channels, out_channels = 8, 4
    n, h, w = 2, 8, 8
    ks = jax.random.split(key, 8)

    # x1: low-res feature map [N, Cin, H, W]; x2: skip connection [N, Cin//2, 2H, 2W]
    x1 = jax.random.normal(ks[0], (n, in_channels, h, w), jnp.float32)
    x2 = jax.random.normal(ks[1], (n, in_channels // 2, 2 * h, 2 * w), jnp.float32)

    params = {
        # ConvTranspose2d(in, in//2, k=2, s=2): weight [Cin, Cin//2, 2, 2]
        "up_w": 0.1 * jax.random.normal(ks[2], (in_channels, in_channels // 2, 2, 2), jnp.float32),
        "up_b": 0.1 * jax.random.normal(ks[3], (in_channels // 2,), jnp.float32),
        # DoubleConv (mid = out): Conv2d(in, out, 3, pad=1), Conv2d(out, out, 3, pad=1)
        "conv1_w": 0.1 * jax.random.normal(ks[4], (out_channels, in_channels, 3, 3), jnp.float32),
        "conv1_b": 0.1 * jax.random.normal(ks[5], (out_channels,), jnp.float32),
        "conv2_w": 0.1 * jax.random.normal(ks[6], (out_channels, out_channels, 3, 3), jnp.float32),
        "conv2_b": 0.1 * jax.random.normal(ks[7], (out_channels,), jnp.float32),
    }

    out = jax.block_until_ready(up_forward(params, x1, x2))
    ref = jax.block_until_ready(up_reference(params, x1, x2))

    assert out.shape == (n, out_channels, 2 * h, 2 * w), out.shape
    # bf16 MXU matmuls (f32 accumulation, bf16 inputs/intermediate activation) vs. the
    # f32 reference: bf16-appropriate tolerance; structural errors would be O(0.3).
    np.testing.assert_allclose(np.asarray(out), np.asarray(ref), atol=3e-2, rtol=3e-2)
    print("KERNEL_OK")
</pallas_src>

<mosaic_0001>
module attributes {stable_mosaic.version = 11 : i64} {
  func.func @_upsample2x2_kernel(%arg0: i32, %arg1: memref<1x8x8x8xbf16, #tpu.memory_space<vmem>>, %arg2: memref<8x16xbf16, #tpu.memory_space<vmem>>, %arg3: memref<1x16xf32, #tpu.memory_space<vmem>>, %arg4: memref<1x8x2x8x8xbf16, #tpu.memory_space<vmem>>) attributes {dimension_semantics = [#tpu.dimension_semantics<parallel>], iteration_bounds = array<i64: 2>, scalar_prefetch = 0 : i64, scratch_operands = 0 : i64, tpu.core_type = #tpu.core_type<tc>, window_params = [{transform_indices = @transform_0, window_bounds = array<i64: 1, 8, 8, 8>}, {pipeline_mode = #tpu.pipeline_mode<synchronous>, transform_indices = @transform_1, window_bounds = array<i64: 8, 16>}, {pipeline_mode = #tpu.pipeline_mode<synchronous>, transform_indices = @transform_2, window_bounds = array<i64: 1, 16>}, {transform_indices = @transform_3, window_bounds = array<i64: 1, 8, 2, 8, 8>}]} {
    %c0 = arith.constant 0 : index
    %c0_0 = arith.constant 0 : index
    %c0_1 = arith.constant 0 : index
    %c0_2 = arith.constant 0 : index
    %0 = vector.load %arg1[%c0, %c0_0, %c0_1, %c0_2] : memref<1x8x8x8xbf16, #tpu.memory_space<vmem>>, vector<1x8x8x8xbf16>
    %1 = vector.shape_cast %0 : vector<1x8x8x8xbf16> to vector<8x8x8xbf16>
    %2 = vector.shape_cast %1 : vector<8x8x8xbf16> to vector<64x8xbf16>
    %c0_3 = arith.constant 0 : index
    %c0_4 = arith.constant 0 : index
    %3 = vector.load %arg2[%c0_3, %c0_4] : memref<8x16xbf16, #tpu.memory_space<vmem>>, vector<8x16xbf16>
    %cst = arith.constant dense<0.000000e+00> : vector<64x16xf32>
    %4 = tpu.matmul %2, %3, %cst {dimension_numbers = #tpu.dot_dimension_numbers<[1], [0], [0], [1], [0, 0, 1, 1], [], []>} : vector<64x8xbf16>, vector<8x16xbf16>, vector<64x16xf32> -> vector<64x16xf32>
    %c0_5 = arith.constant 0 : index
    %c0_6 = arith.constant 0 : index
    %5 = vector.load %arg3[%c0_5, %c0_6] : memref<1x16xf32, #tpu.memory_space<vmem>>, vector<1x16xf32>
    %6 = vector.broadcast %5 : vector<1x16xf32> to vector<64x16xf32>
    %7 = arith.addf %4, %6 : vector<64x16xf32>
    %8 = vector.extract_strided_slice %7 {offsets = [0, 0], sizes = [64, 8], strides = [1, 1]} : vector<64x16xf32> to vector<64x8xf32>
    %9 = vector.shape_cast %8 : vector<64x8xf32> to vector<1x8x1x8x8xf32>
    %10 = arith.truncf %9 : vector<1x8x1x8x8xf32> to vector<1x8x1x8x8xbf16>
    %c0_7 = arith.constant 0 : index
    %c0_8 = arith.constant 0 : index
    %c0_9 = arith.constant 0 : index
    %c0_10 = arith.constant 0 : index
    %c0_11 = arith.constant 0 : index
    %11 = vector.load %arg4[%c0_7, %c0_8, %c0_9, %c0_10, %c0_11] : memref<1x8x2x8x8xbf16, #tpu.memory_space<vmem>>, vector<1x8x1x8x8xbf16>
    tpu.vector_store %arg4[%c0_7, %c0_8, %c0_9, %c0_10, %c0_11], %10 {strides = array<i32>} : memref<1x8x2x8x8xbf16, #tpu.memory_space<vmem>>, vector<1x8x1x8x8xbf16>,
    %12 = vector.extract_strided_slice %7 {offsets = [0, 8], sizes = [64, 8], strides = [1, 1]} : vector<64x16xf32> to vector<64x8xf32>
    %13 = vector.shape_cast %12 : vector<64x8xf32> to vector<1x8x1x8x8xf32>
    %14 = arith.truncf %13 : vector<1x8x1x8x8xf32> to vector<1x8x1x8x8xbf16>
    %c0_12 = arith.constant 0 : index
    %c0_13 = arith.constant 0 : index
    %c1 = arith.constant 1 : index
    %c0_14 = arith.constant 0 : index
    %c0_15 = arith.constant 0 : index
    %15 = vector.load %arg4[%c0_12, %c0_13, %c1, %c0_14, %c0_15] : memref<1x8x2x8x8xbf16, #tpu.memory_space<vmem>>, vector<1x8x1x8x8xbf16>
    tpu.vector_store %arg4[%c0_12, %c0_13, %c1, %c0_14, %c0_15], %14 {strides = array<i32>} : memref<1x8x2x8x8xbf16, #tpu.memory_space<vmem>>, vector<1x8x1x8x8xbf16>,
    return
  }
  func.func @transform_0(%arg0: i32) -> (i32, i32, i32, i32) {
    %c0_i32 = arith.constant 0 : i32
    %c0_i32_0 = arith.constant 0 : i32
    %c0_i32_1 = arith.constant 0 : i32
    %c0_i32_2 = arith.constant 0 : i32
    return %arg0, %c0_i32, %c0_i32_0, %c0_i32_1 : i32, i32, i32, i32
  }
  func.func @transform_1(%arg0: i32) -> (i32, i32) {
    %c0_i32 = arith.constant 0 : i32
    %c0_i32_0 = arith.constant 0 : i32
    %c0_i32_1 = arith.constant 0 : i32
    return %c0_i32, %c0_i32_0 : i32, i32
  }
  func.func @transform_2(%arg0: i32) -> (i32, i32) {
    %c0_i32 = arith.constant 0 : i32
    %c0_i32_0 = arith.constant 0 : i32
    %c0_i32_1 = arith.constant 0 : i32
    return %c0_i32, %c0_i32_0 : i32, i32
  }
  func.func @transform_3(%arg0: i32) -> (i32, i32, i32, i32, i32) {
    %c0_i32 = arith.constant 0 : i32
    %c0_i32_0 = arith.constant 0 : i32
    %c0_i32_1 = arith.constant 0 : i32
    %c0_i32_2 = arith.constant 0 : i32
    %c0_i32_3 = arith.constant 0 : i32
    return %arg0, %c0_i32, %c0_i32_0, %c0_i32_1, %c0_i32_2 : i32, i32, i32, i32, i32
  }
}

</mosaic_0001>

<llo_original>
// kernel: tpu_custom_call.1
$region0: #{tpu_custom_call.1}
  #allocation0 [shape = 'u32[]', space=smem, size = 0x4, offset = 0x4, fixed_abs, tag = 'smem constant byte address 0x4 - core index']
  #allocation1 [shape = 'u32[72,128]{1,0:T(1,128)}', space=vmem, size = 0x9000, scoped, tag = 'internal scratch']
  %s0 = inlined_call_operand.hbm [shape: bf16[2,8,8,8], index: 0, kind: input, shape index: {}]
  %s1 = inlined_call_operand.hbm [shape: bf16[8,16], index: 1, kind: input, shape index: {}]
  %s2 = inlined_call_operand.vmem [shape: f32[1,16], index: 2, kind: input, shape index: {}]
  %s3 = inlined_call_operand.hbm [shape: bf16[2,8,2,8,8], index: 3, kind: output, shape index: {}]
  %s4 = sld [smem:[#allocation0]]
  $region53: #{tpu_custom_call.1} parent=0
    _
  %s6 = ssub.s32 1, %s4
  %s7 = scalar_select 0, %s6, %s4
  $region1: #{tpu_custom_call.1} parent=0
    #allocation2 [shape = 'u8[32768]{0}', space=vmem, size = 0x8000, scoped, tag = 'input window, operand 0']
    #allocation3 [shape = 's32[2]{0}', space=sflag, size = 0x8, scoped, tag = 'scoped memory for tpu_custom_call.1']
    #allocation4 [shape = 's32[2]{0}', space=sflag, size = 0x8, scoped, tag = 'scoped memory for tpu_custom_call.1']
    #allocation5 [shape = 'u8[2048]{0}', space=vmem, size = 0x800, scoped, tag = 'input window, operand 1, single buffered']
    #allocation6 [shape = 's32[1]{0}', space=sflag, size = 0x4, scoped, tag = 'scoped memory for tpu_custom_call.1']
    #allocation7 [shape = 'u8[65536]{0}', space=vmem, size = 0x10000, scoped, tag = 'output window, operand 0']
    %8 = vsyncpa [#allocation3], 0
    %s9 = scalar_lea.sflag [#allocation3], 1
    %10 = vsyncpa %s9, 0
    %11 = vsyncpa [#allocation6], 0
    %12 = vsyncpa [#allocation4], 0
    %s13 = scalar_lea.sflag [#allocation4], 1
    %14 = vsyncpa %s13, 0
    loop: start=0, step=1, limit=4
    $region2: #{tpu_custom_call.1} parent=1 // loop_pre_header
      _
    $region3: #{tpu_custom_call.1} parent=1 // loop_header
      %s16 = sphi 0, %s20
      %p17 = scmp.ge.s32.totalorder %s16, 4
      %s26 = sphi 0, %s28
      %s29 = sphi 0, %s26
      %s30 = sphi 0, %s29
      %s46 = sphi 0, %s30
      %s50 = sphi 0, %s50
      %s52 = sphi 0, %s50
      %s53 = sphi 0, %s52
      %s67 = sphi 0, %s53
      %s71 = sphi 0, %s71
      %s73 = sphi 0, %s71
      %s74 = sphi 0, %s73
      %s88 = sphi 0, %s74
      %s94 = sphi 0, %s96
      %s97 = sphi 0, %s94
      %s98 = sphi 0, %s97
      %s114 = sphi 0, %s98
    $region4: #{tpu_custom_call.1} parent=1 // loop_header_branch
      %19 = sbr.rel (%p17) target = $region8
    $region5: #{tpu_custom_call.1} parent=1 // loop_body
      %s21 = ssub.s32 %s16, 1
      %s22 = ssub.s32 %s16, 2
      %s23 = sadd.s32 %s16, 1
      %s24 = ssub.s32 %s16, %s23
      %p25 = scmp.eq.s32.totalorder %s24, 0
      %s27 = sadd.s32 %s26, 1
      %s28 = scalar_select %p25, %s26, %s27
      %p31 = pneg %p25
      %p32 = scmp.eq.s32.totalorder %s16, 1
      %p33 = por %p31, %p32
      %p34 = scmp.ne.s32.totalorder %s26, %s29
      %p35 = scmp.eq.s32.totalorder %s16, 0
      %p36 = por %p34, %p35
      %p37 = scmp.ne.s32.totalorder %s26, %s29
      %p38 = scmp.eq.s32.totalorder %s21, 1
      %p39 = por %p37, %p38
      %p40 = scmp.ne.s32.totalorder %s29, %s30
      %p41 = scmp.eq.s32.totalorder %s21, 0
      %p42 = por %p40, %p41
      %p43 = scmp.ne.s32.totalorder %s29, %s30
      %p44 = scmp.eq.s32.totalorder %s22, 1
      %p45 = por %p43, %p44
      %p47 = scmp.ne.s32.totalorder %s30, %s46
      %p48 = scmp.eq.s32.totalorder %s22, 0
      %p49 = por %p47, %p48
      %s51 = sadd.s32 %s50, 1
      %p54 = scmp.eq.s32.totalorder %s16, 1
      %p55 = scmp.ne.s32.totalorder %s50, %s52
      %p56 = scmp.eq.s32.totalorder %s16, 0
      %p57 = por %p55, %p56
      %p58 = scmp.ne.s32.totalorder %s50, %s52
      %p59 = scmp.eq.s32.totalorder %s21, 1
      %p60 = por %p58, %p59
      %p61 = scmp.ne.s32.totalorder %s52, %s53
      %p62 = scmp.eq.s32.totalorder %s21, 0
      %p63 = por %p61, %p62
      %p64 = scmp.ne.s32.totalorder %s52, %s53
      %p65 = scmp.eq.s32.totalorder %s22, 1
      %p66 = por %p64, %p65
      %p68 = scmp.ne.s32.totalorder %s53, %s67
      %p69 = scmp.eq.s32.totalorder %s22, 0
      %p70 = por %p68, %p69
      %s72 = sadd.s32 %s71, 1
      %p75 = scmp.eq.s32.totalorder %s16, 1
      %p76 = scmp.ne.s32.totalorder %s71, %s73
      %p77 = scmp.eq.s32.totalorder %s16, 0
      %p78 = por %p76, %p77
      %p79 = scmp.ne.s32.totalorder %s71, %s73
      %p80 = scmp.eq.s32.totalorder %s21, 1
      %p81 = por %p79, %p80
      %p82 = scmp.ne.s32.totalorder %s73, %s74
      %p83 = scmp.eq.s32.totalorder %s21, 0
      %p84 = por %p82, %p83
      %p85 = scmp.ne.s32.totalorder %s73, %s74
      %p86 = scmp.eq.s32.totalorder %s22, 1
      %p87 = por %p85, %p86
      %p89 = scmp.ne.s32.totalorder %s74, %s88
      %p90 = scmp.eq.s32.totalorder %s22, 0
      %p91 = por %p89, %p90
      %s92 = ssub.s32 %s16, %s23
      %p93 = scmp.eq.s32.totalorder %s92, 0
      %s95 = sadd.s32 %s94, 1
      %s96 = scalar_select %p93, %s94, %s95
      %p99 = pneg %p93
      %p100 = scmp.eq.s32.totalorder %s16, 1
      %p101 = por %p99, %p100
      %p102 = scmp.ne.s32.totalorder %s94, %s97
      %p103 = scmp.eq.s32.totalorder %s16, 0
      %p104 = por %p102, %p103
      %p105 = scmp.ne.s32.totalorder %s94, %s97
      %p106 = scmp.eq.s32.totalorder %s21, 1
      %p107 = por %p105, %p106
      %p108 = scmp.ne.s32.totalorder %s97, %s98
      %p109 = scmp.eq.s32.totalorder %s21, 0
      %p110 = por %p108, %p109
      %p111 = scmp.ne.s32.totalorder %s97, %s98
      %p112 = scmp.eq.s32.totalorder %s22, 1
      %p113 = por %p111, %p112
      %p115 = scmp.ne.s32.totalorder %s98, %s114
      %p116 = scmp.eq.s32.totalorder %s22, 0
      %p117 = por %p115, %p116
      %p118 = scmp.le.s32.totalorder 1, %s16
      %p119 = scmp.lt.s32.totalorder %s16, 3
      %p120 = pnand %p118, %p119
      %p121 = pneg %p120
      // Predicated region
      $region9: #{tpu_custom_call.1} parent=5 // pred_check
        _
      $region10: #{tpu_custom_call.1} parent=5 // pred_check_branch
        %123 = sbr.rel (%p120) target = $region12
      $region11: #{tpu_custom_call.1} parent=5 // pred_region
        %s124 = ssub.s32 %s16, 1
        // Predicated region
        $region13: #{tpu_custom_call.1} parent=11 // pred_check
          %p125 = pneg %p63
        $region14: #{tpu_custom_call.1} parent=11 // pred_check_branch
          %127 = sbr.rel (%p125) target = $region16
        $region15: #{tpu_custom_call.1} parent=11 // pred_region
          %129 = vsyncadd [#allocation6], 0
          %s131 = sshll.u32 %s1, 4
          %s132 = int_to_ptr.hbm [resolvable:$true] %s131
          %s133 = sshll.u32 [#allocation5], 4
          %s134 = int_to_ptr.vmem [resolvable:$true] %s133
          %136 = dma.hbm_to_vmem [thread:$0]  %s132, 64, %s134, [#allocation6]
        $region16: #{tpu_custom_call.1} parent=11 // pred_fallthru
          _
        // Predicated region
        $region17: #{tpu_custom_call.1} parent=11 // pred_check
          %p137 = pneg %p84
        $region18: #{tpu_custom_call.1} parent=11 // pred_check_branch
          %139 = sbr.rel (%p137) target = $region20
        $region19: #{tpu_custom_call.1} parent=11 // pred_region
          _
        $region20: #{tpu_custom_call.1} parent=11 // pred_fallthru
          _
      $region12: #{tpu_custom_call.1} parent=5 // pred_fallthru
        _
      %p140 = scmp.lt.s32.totalorder %s16, 2
      // Predicated region
      $region21: #{tpu_custom_call.1} parent=5 // pred_check
        %p141 = pneg %p140
      $region22: #{tpu_custom_call.1} parent=5 // pred_check_branch
        %143 = sbr.rel (%p141) target = $region24
      $region23: #{tpu_custom_call.1} parent=5 // pred_region
        // Predicated region
        $region25: #{tpu_custom_call.1} parent=23 // pred_check
          %p144 = pneg %p36
        $region26: #{tpu_custom_call.1} parent=23 // pred_check_branch
          %146 = sbr.rel (%p144) target = $region28
        $region27: #{tpu_custom_call.1} parent=23 // pred_region
          %s147 = sand.u32 %s26, 1
          %s148 = scalar_lea.sflag [#allocation3], %s147
          %s149 = sand.u32 %s26, 1
          %s150 = smul.addr %s149, 32
          %s151 = scalar_lea.vmem [#allocation2], %s150
          %153 = vsyncadd %s148, 0
          %s154 = smul.addr %s16, 8
          %s155 = smul.addr %s154, 4
          %s156 = scalar_lea.hbm %s0, %s155
          %s157 = sshll.u32 %s156, 4
          %s158 = int_to_ptr.hbm [resolvable:$true] %s157
          %s159 = sshll.u32 %s151, 4
          %s160 = int_to_ptr.vmem [resolvable:$true] %s159
          %165 = dma.hbm_to_vmem [thread:$0]  %s158, 512, %s160, %s148, 64, 64, 4
        $region28: #{tpu_custom_call.1} parent=23 // pred_fallthru
          _
      $region24: #{tpu_custom_call.1} parent=5 // pred_fallthru
        _
      %p166 = scmp.le.s32.totalorder 1, %s16
      %p167 = scmp.lt.s32.totalorder %s16, 3
      %p168 = pnand %p166, %p167
      %p169 = pneg %p168
      // Predicated region
      $region29: #{tpu_custom_call.1} parent=5 // pred_check
        _
      $region30: #{tpu_custom_call.1} parent=5 // pred_check_branch
        %171 = sbr.rel (%p168) target = $region32
      $region31: #{tpu_custom_call.1} parent=5 // pred_region
        %s172 = ssub.s32 %s16, 1
        %s173 = sand.u32 %s29, 1
        %s174 = scalar_lea.sflag [#allocation3], %s173
        %s175 = sand.u32 %s29, 1
        %s176 = smul.addr %s175, 32
        %s177 = scalar_lea.vmem [#allocation2], %s176
        // Predicated region
        $region33: #{tpu_custom_call.1} parent=31 // pred_check
          %p178 = pneg %p42
        $region34: #{tpu_custom_call.1} parent=31 // pred_check_branch
          %180 = sbr.rel (%p178) target = $region36
        $region35: #{tpu_custom_call.1} parent=31 // pred_region
          %182 = dma.done %s174, 512
        $region36: #{tpu_custom_call.1} parent=31 // pred_fallthru
          _
        // Predicated region
        $region37: #{tpu_custom_call.1} parent=31 // pred_check
          %p183 = pneg %p63
        $region38: #{tpu_custom_call.1} parent=31 // pred_check_branch
          %185 = sbr.rel (%p183) target = $region40
        $region39: #{tpu_custom_call.1} parent=31 // pred_region
          %187 = dma.done [#allocation6], 64
        $region40: #{tpu_custom_call.1} parent=31 // pred_fallthru
          _
        %s188 = sand.u32 %s29, 1
        %s189 = scalar_lea.sflag [#allocation3], %s188
        %s190 = sand.u32 %s29, 1
        %s191 = smul.addr %s190, 32
        %s192 = scalar_lea.vmem [#allocation2], %s191
        %p193 = pneg %p42
        %p194 = pneg %p39
        %p195 = pneg %p63
        %p196 = pneg %p60
        %p197 = pneg %p84
        %p198 = pneg %p81
        %p199 = pneg %p110
        %p200 = pneg %p107
        %s201 = sand.u32 %s97, 1
        %s202 = scalar_lea.sflag [#allocation4], %s201
        %s203 = sand.u32 %s97, 1
        %s204 = smul.addr %s203, 64
        %s205 = scalar_lea.vmem [#allocation7], %s204
        %v207 = vld [vmem:[%s177] sm:$0xf]
        %v208 = vld [vmem:[%s177 + $0x4] sm:$0xf]
        %v209 = vld [vmem:[%s177 + $0x8] sm:$0xf]
        %v210 = vld [vmem:[%s177 + $0xc] sm:$0xf]
        %v211 = vld [vmem:[%s177 + $0x10] sm:$0xf]
        %v212 = vld [vmem:[%s177 + $0x14] sm:$0xf]
        %v213 = vld [vmem:[%s177 + $0x18] sm:$0xf]
        %v214 = vld [vmem:[%s177 + $0x1c] sm:$0xf]
        %v215 = vld [vmem:[#allocation5] sm:$0xf]
        %v216 = vld [vmem:[%s2] sm:$0x1]
        %v218 = vperm.slane %v216, 0
        %v228 = vunpack.c.l.b16 %v207
        %v229 = vunpack.c.l.b16 %v208
        %v230 = vunpack.c.l.b16 %v209
        %v231 = vunpack.c.l.b16 %v210
        %v232 = vunpack.c.l.b16 %v211
        %v233 = vunpack.c.l.b16 %v212
        %v234 = vunpack.c.l.b16 %v213
        %v235 = vunpack.c.l.b16 %v214
        %v236 = vpack.c.b16 %v229, %v228
        %v237 = vpack.c.b16 %v231, %v230
        %v238 = vpack.c.b16 %v233, %v232
        %v239 = vpack.c.b16 %v235, %v234
        %vm240 = vcmask 64512
        %v242 = vsel %vm240, %v236, 0
        %v245 = vsel %vm240, %v237, 0
        %v248 = vsel %vm240, %v238, 0
        %v251 = vsel %vm240, %v239, 0
        %vm253 = vcmask 1043456
        %v255 = vsel %vm253, %v215, 0
        %257 = vmatpush.bf16.msra.mxu0 0
        %258 = vmatpush.bf16.msra.mxu0 0
        %259 = vmatpush.bf16.msra.mxu0 0
        %260 = vmatpush.bf16.msra.mxu0 0
        %261 = vmatpush.bf16.msra.mxu0 0
        %262 = vmatpush.bf16.msra.mxu0 0
        %263 = vmatpush.bf16.msra.mxu0 0
        %264 = vmatpush.bf16.msra.mxu0 %v255
        %265 = vmatmul.bf16.gmra.mxu0 %v242
        %v266 = vpop.f32.mrf.mxu0
        %v267 = vadd.f32 %v218, %v266
        %v268 = vpop.f32.mrf.mxu0
        %v269 = vadd.f32 %v218, %v268
        %270 = vmatmul.bf16.gmra.mxu0 %v245
        %v271 = vpop.f32.mrf.mxu0
        %v272 = vadd.f32 %v218, %v271
        %v273 = vpop.f32.mrf.mxu0
        %v274 = vadd.f32 %v218, %v273
        %275 = vmatmul.bf16.gmra.mxu0 %v248
        %v276 = vpop.f32.mrf.mxu0
        %v277 = vadd.f32 %v218, %v276
        %v278 = vpop.f32.mrf.mxu0
        %v279 = vadd.f32 %v218, %v278
        %280 = vmatmul.bf16.gmra.mxu0 %v251
        %v281 = vpop.f32.mrf.mxu0
        %v282 = vadd.f32 %v218, %v281
        %v283 = vpop.f32.mrf.mxu0
        %v284 = vadd.f32 %v218, %v283
        %285 = vdwg.mxu0
        %v286 = vpack.c.bf16 %v267, %v267
        %v287 = vpack.c.bf16 %v269, %v269
        %v288 = vpack.c.bf16 %v272, %v272
        %v289 = vpack.c.bf16 %v274, %v274
        %v290 = vpack.c.bf16 %v277, %v277
        %v291 = vpack.c.bf16 %v279, %v279
        %v292 = vpack.c.bf16 %v282, %v282
        %v293 = vpack.c.bf16 %v284, %v284
        %vm294 = vcmask 60416
        %295 = vst.msk [vmem:[%s205] sm:$0xf] %vm294, %v286
        %296 = vst.msk [vmem:[%s205 + $0x8] sm:$0xf] %vm294, %v287
        %297 = vst.msk [vmem:[%s205 + $0x10] sm:$0xf] %vm294, %v288
        %298 = vst.msk [vmem:[%s205 + $0x18] sm:$0xf] %vm294, %v289
        %299 = vst.msk [vmem:[%s205 + $0x20] sm:$0xf] %vm294, %v290
        %300 = vst.msk [vmem:[%s205 + $0x28] sm:$0xf] %vm294, %v291
        %301 = vst.msk [vmem:[%s205 + $0x30] sm:$0xf] %vm294, %v292
        %302 = vst.msk [vmem:[%s205 + $0x38] sm:$0xf] %vm294, %v293
        %311 = vrot.lane.b32.xlu0 %v286, 120
        %v312 = vpop.permute.xlu0 %311
        %313 = vrot.lane.b32.xlu0 %v287, 120
        %v314 = vpop.permute.xlu0 %313
        %315 = vrot.lane.b32.xlu0 %v288, 120
        %v316 = vpop.permute.xlu0 %315
        %317 = vrot.lane.b32.xlu0 %v289, 120
        %v318 = vpop.permute.xlu0 %317
        %319 = vrot.lane.b32.xlu0 %v290, 120
        %v320 = vpop.permute.xlu0 %319
        %321 = vrot.lane.b32.xlu0 %v291, 120
        %v322 = vpop.permute.xlu0 %321
        %323 = vrot.lane.b32.xlu0 %v292, 120
        %v324 = vpop.permute.xlu0 %323
        %325 = vrot.lane.b32.xlu0 %v293, 120
        %v326 = vpop.permute.xlu0 %325
        %s335 = scalar_lea.vmem %s205, 4 [#allocation7]
        %336 = vst.msk [vmem:[%s335] sm:$0xf] %vm294, %v312
        %337 = vst.msk [vmem:[%s335 + $0x8] sm:$0xf] %vm294, %v314
        %338 = vst.msk [vmem:[%s335 + $0x10] sm:$0xf] %vm294, %v316
        %339 = vst.msk [vmem:[%s335 + $0x18] sm:$0xf] %vm294, %v318
        %340 = vst.msk [vmem:[%s335 + $0x20] sm:$0xf] %vm294, %v320
        %341 = vst.msk [vmem:[%s335 + $0x28] sm:$0xf] %vm294, %v322
        %342 = vst.msk [vmem:[%s335 + $0x30] sm:$0xf] %vm294, %v324
        %343 = vst.msk [vmem:[%s335 + $0x38] sm:$0xf] %vm294, %v326
        %s344 = sand.u32 %s97, 1
        %s345 = scalar_lea.sflag [#allocation4], %s344
        %s346 = sand.u32 %s97, 1
        %s347 = smul.addr %s346, 64
        %s348 = scalar_lea.vmem [#allocation7], %s347
        // Predicated region
        $region41: #{tpu_custom_call.1} parent=31 // pred_check
          %p349 = pneg %p107
        $region42: #{tpu_custom_call.1} parent=31 // pred_check_branch
          %351 = sbr.rel (%p349) target = $region44
        $region43: #{tpu_custom_call.1} parent=31 // pred_region
          %353 = vsyncadd %s345, 0
          %s354 = smul.addr %s21, 16
          %s355 = smul.addr %s354, 4
          %s356 = scalar_lea.hbm %s3, %s355
          %s357 = sshll.u32 %s348, 4
          %s358 = int_to_ptr.vmem [resolvable:$true] %s357
          %s359 = sshll.u32 %s356, 4
          %s360 = int_to_ptr.hbm [resolvable:$true] %s359
          %365 = dma.vmem_to_hbm [thread:$0]  %s358, 1024, %s360, %s345, 64, 64, 4
        $region44: #{tpu_custom_call.1} parent=31 // pred_fallthru
          _
      $region32: #{tpu_custom_call.1} parent=5 // pred_fallthru
        _
      %p366 = scmp.le.s32.totalorder 2, %s16
      // Predicated region
      $region45: #{tpu_custom_call.1} parent=5 // pred_check
        %p367 = pneg %p366
      $region46: #{tpu_custom_call.1} parent=5 // pred_check_branch
        %369 = sbr.rel (%p367) target = $region48
      $region47: #{tpu_custom_call.1} parent=5 // pred_region
        %s370 = ssub.s32 %s16, 2
        // Predicated region
        $region49: #{tpu_custom_call.1} parent=47 // pred_check
          %p371 = pneg %p113
        $region50: #{tpu_custom_call.1} parent=47 // pred_check_branch
          %373 = sbr.rel (%p371) target = $region52
        $region51: #{tpu_custom_call.1} parent=47 // pred_region
          %s374 = sand.u32 %s98, 1
          %s375 = scalar_lea.sflag [#allocation4], %s374
          %s376 = sand.u32 %s98, 1
          %s377 = smul.addr %s376, 64
          %s378 = scalar_lea.vmem [#allocation7], %s377
          %380 = dma.done %s375, 1024
        $region52: #{tpu_custom_call.1} parent=47 // pred_fallthru
          _
      $region48: #{tpu_custom_call.1} parent=5 // pred_fallthru
        _
    $region6: #{tpu_custom_call.1} parent=1 // loop_footer
      %s20 = sadd.s32 1, %s16
    $region7: #{tpu_custom_call.1} parent=1 // loop_footer_branch
      %15 = sbr.rel target = $region3
    $region8: #{tpu_custom_call.1} parent=1 // loop_exit
      _
    %381 = vsyncpa [#allocation3], 1
    %s382 = scalar_lea.sflag [#allocation3], 1
    %383 = vsyncpa %s382, 1
    %384 = vsyncpa [#allocation6], 1
    %385 = vsyncpa [#allocation4], 1
    %s386 = scalar_lea.sflag [#allocation4], 1
    %387 = vsyncpa %s386, 1

</llo_original>
